<compile_context>
chip_gen: v5e
topology: v5e:2x2
jax: 0.10.0
libtpu: 0.0.40
codegen_flags: <defaults>
</compile_context>

<pallas_src>
import functools

import jax
import jax.numpy as jnp
from jax.experimental import pallas as pl
from jax.experimental.pallas import tpu as pltpu


# ----------------------------- Pallas kernel -----------------------------

def _fused_matmul_t_kernel(w_ref, x_ref, bias_ref, o_ref, *, act):
    # w: (Cout, K) bf16, x: (K, TM) bf16, bias: (Cout, 1) f32, o: (Cout, TM) f32.
    y = jnp.dot(w_ref[...], x_ref[...], preferred_element_type=jnp.float32)
    y = y + bias_ref[...]                           # broadcast over lanes (M)
    if act == "lrelu":
        y = jnp.where(y > 0, y, 0.2 * y)
    elif act == "sigmoid":
        # exact logistic (exp lands on the EUP slot); guarantees output in [0, 1]
        y = 1.0 / (1.0 + jnp.exp(-y))
    o_ref[...] = y.astype(o_ref.dtype)


_TM = 256  # lane tile: multiple of 128, sized well under v7x's 64 MiB VMEM


def fused_matmul_t(w_mat, x_t, bias, act="none"):
    """(Cout, K) @ (K, M) + bias with fused activation; lane-dense (Cout, M) out."""
    cout, k = w_mat.shape
    k2, m = x_t.shape
    assert k == k2
    if m <= _TM:
        tm, mp = m, m                               # single full-width block
    else:
        tm = _TM
        mp = ((m + _TM - 1) // _TM) * _TM
        if mp != m:                                 # pad M so blocks divide evenly
            x_t = jnp.pad(x_t, ((0, 0), (0, mp - m)))
    grid_m = mp // tm
    kernel = functools.partial(_fused_matmul_t_kernel, act=act)
    out = pl.pallas_call(
        kernel,
        out_shape=jax.ShapeDtypeStruct((cout, mp), jnp.float32),
        grid=(grid_m,),
        in_specs=[
            pl.BlockSpec((cout, k), lambda i: (0, 0)),   # weights resident
            pl.BlockSpec((k, tm), lambda i: (0, i)),     # stream M tiles
            pl.BlockSpec((cout, 1), lambda i: (0, 0)),
        ],
        out_specs=pl.BlockSpec((cout, tm), lambda i: (0, i)),
        compiler_params=pltpu.CompilerParams(
            dimension_semantics=("parallel",)),          # megacore on v7x
    )(w_mat, x_t, bias)
    return out[:, :m] if mp != m else out


# ------------------------------ JAX glue ----------------------------------

def im2col_cnhw(x, kh, kw, stride, pad):
    # x: (C, N, H, W) -> (C*KH*KW, N*OH*OW); K ordered (c, kh, kw) to match
    # PyTorch's weight.reshape(Cout, Cin*KH*KW). No transposes needed.
    c, n, h, w = x.shape
    xp = jnp.pad(x, ((0, 0), (0, 0), (pad, pad), (pad, pad)))
    oh = (h + 2 * pad - kh) // stride + 1
    ow = (w + 2 * pad - kw) // stride + 1
    taps = []
    for i in range(kh):
        for j in range(kw):
            taps.append(xp[:, :, i:i + stride * oh:stride, j:j + stride * ow:stride])
    p = jnp.stack(taps, axis=1)                     # (c, kh*kw, n, oh, ow)
    return p.reshape(c * kh * kw, n * oh * ow), oh, ow
    # TODO(synk): im2col could be moved inside the Pallas kernel (shifted VMEM
    # slices) to avoid materializing the expanded patch matrix in HBM.


def conv2d_fused(x_cnhw, layer):
    """Conv2d(bias=False) + folded eval-mode BN + activation, CNHW in/out."""
    patches, oh, ow = im2col_cnhw(x_cnhw, layer["kh"], layer["kw"],
                                  layer["stride"], layer["pad"])
    y = fused_matmul_t(layer["wm"], patches.astype(jnp.bfloat16),
                       layer["bias"], act=layer["act"])      # (Cout, N*OH*OW)
    cout = layer["wm"].shape[0]
    n = x_cnhw.shape[1]
    return y.reshape(cout, n, oh, ow)                        # CNHW, no transpose


# --------------------------- parameter setup ------------------------------

def _prep_layer(w, stride, pad, bn, act):
    """One-time prep: reshape conv weight to matmul form, fold BN, cast bf16."""
    cout, cin, kh, kw = w.shape
    wm = w.reshape(cout, cin * kh * kw)
    if bn is None:
        bias = jnp.zeros((cout, 1), jnp.float32)
    else:
        gamma, beta, mean, var, eps = bn
        s = gamma / jnp.sqrt(var + eps)
        wm = wm * s[:, None]                          # fold BN scale into W
        bias = (beta - mean * s).reshape(cout, 1)
    return dict(wm=wm.astype(jnp.bfloat16), bias=bias,
                kh=kh, kw=kw, stride=stride, pad=pad, act=act)


def init_params(key, isize, nz, nc, ndf, n_extra_layers=0):
    assert isize % 16 == 0, "isize has to be a multiple of 16"

    def wnorm(k, shape):        # DCGAN-style N(0, 0.02) init
        return jax.random.normal(k, shape, jnp.float32) * 0.02

    def bnparams(k, c):
        k1, k2 = jax.random.split(k)
        gamma = 1.0 + 0.1 * jax.random.normal(k1, (c,), jnp.float32)
        beta = 0.1 * jax.random.normal(k2, (c,), jnp.float32)
        mean = jnp.zeros((c,), jnp.float32)
        var = jnp.ones((c,), jnp.float32)
        return (gamma, beta, mean, var, 1e-5)

    encoder = []
    key, sub = jax.random.split(key)
    encoder.append(_prep_layer(wnorm(sub, (ndf, nc, 4, 4)), 2, 1, None, "lrelu"))
    csize, cndf = isize // 2, ndf

    for _ in range(n_extra_layers):
        key, kw_, kb_ = jax.random.split(key, 3)
        encoder.append(_prep_layer(wnorm(kw_, (cndf, cndf, 3, 3)), 1, 1,
                                   bnparams(kb_, cndf), "lrelu"))

    while csize > 4:
        key, kw_, kb_ = jax.random.split(key, 3)
        encoder.append(_prep_layer(wnorm(kw_, (cndf * 2, cndf, 4, 4)), 2, 1,
                                   bnparams(kb_, cndf * 2), "lrelu"))
        cndf *= 2
        csize //= 2

    key, sub = jax.random.split(key)
    encoder.append(_prep_layer(wnorm(sub, (nz, cndf, 4, 4)), 1, 0, None, "none"))

    key, sub = jax.random.split(key)
    classifier = _prep_layer(wnorm(sub, (1, nz, 3, 3)), 1, 1, None, "sigmoid")
    return dict(encoder=encoder, classifier=classifier)


# ------------------------------ forward -----------------------------------

def discriminator_deepem_forward(params, x):
    # x: (N, C, H, W) as in PyTorch; switch to CNHW once up front.
    h = jnp.transpose(x, (1, 0, 2, 3))
    # TODO(synk): all encoder layers could be fused into a single pallas_call
    # (total weights < 1 MiB fit VMEM) to remove per-layer launch overhead.
    for layer in params["encoder"]:
        h = conv2d_fused(h, layer)
    # h: (nz, N, 1, 1) in CNHW
    nz, n = h.shape[0], h.shape[1]
    features = jnp.squeeze(h.reshape(nz, n).T)        # mirrors torch .squeeze()
    # TODO(synk): nn.Dropout() in PyTorch training mode would stochastically zero
    # features; eval-mode (identity) semantics are used here.
    # NOTE: the reference code feeds the squeezed 2-D tensor to Conv2d, which only
    # type-checks for the 4-D pre-squeeze map; we apply the classifier to the
    # (nz, N, 1, 1) features (zero-padded 3x3 conv + sigmoid).
    cls = conv2d_fused(h, params["classifier"])       # (1, N, 1, 1)
    cls = cls.reshape(-1, 1).squeeze(1)               # (N,)
    return cls, features


# -------------------------------- main -------------------------------------

if __name__ == "__main__":
    # opt: isize=16, nz=8, nc=3, ngf=8, ngpu=1, extralayers=0
    isize, nz, nc, ngf, extralayers = 16, 8, 3, 8, 0
    key = jax.random.PRNGKey(0)
    kx, kp = jax.random.split(key)
    x = jax.random.normal(kx, (2, nc, isize, isize), jnp.float32)

    params = init_params(kp, isize, nz, nc, ngf, extralayers)
    fwd = jax.jit(lambda inp: discriminator_deepem_forward(params, inp))
    classifier_out, features = fwd(x)
    jax.block_until_ready((classifier_out, features))

    assert classifier_out.shape == (2,)
    assert features.shape == (2, nz)
    assert bool(jnp.all((classifier_out >= 0.0) & (classifier_out <= 1.0)))
    print("KERNEL_OK")
</pallas_src>

<mosaic_0001>
module attributes {stable_mosaic.version = 11 : i64} {
  func.func @_fused_matmul_t_kernel(%arg0: i32, %arg1: memref<8x48xbf16, #tpu.memory_space<vmem>>, %arg2: memref<48x128xbf16, #tpu.memory_space<vmem>>, %arg3: memref<8x1xf32, #tpu.memory_space<vmem>>, %arg4: memref<8x128xf32, #tpu.memory_space<vmem>>) attributes {dimension_semantics = [#tpu.dimension_semantics<parallel>], iteration_bounds = array<i64: 1>, scalar_prefetch = 0 : i64, scratch_operands = 0 : i64, tpu.core_type = #tpu.core_type<tc>, window_params = [{pipeline_mode = #tpu.pipeline_mode<synchronous>, transform_indices = @transform_0, window_bounds = array<i64: 8, 48>}, {transform_indices = @transform_1, window_bounds = array<i64: 48, 128>}, {pipeline_mode = #tpu.pipeline_mode<synchronous>, transform_indices = @transform_2, window_bounds = array<i64: 8, 1>}, {transform_indices = @transform_3, window_bounds = array<i64: 8, 128>}]} {
    %c0 = arith.constant 0 : index
    %c0_0 = arith.constant 0 : index
    %0 = vector.load %arg1[%c0, %c0_0] : memref<8x48xbf16, #tpu.memory_space<vmem>>, vector<8x48xbf16>
    %c0_1 = arith.constant 0 : index
    %c0_2 = arith.constant 0 : index
    %1 = vector.load %arg2[%c0_1, %c0_2] : memref<48x128xbf16, #tpu.memory_space<vmem>>, vector<48x128xbf16>
    %cst = arith.constant dense<0.000000e+00> : vector<8x128xf32>
    %2 = tpu.matmul %0, %1, %cst {dimension_numbers = #tpu.dot_dimension_numbers<[1], [0], [0], [1], [0, 0, 1, 1], [], []>} : vector<8x48xbf16>, vector<48x128xbf16>, vector<8x128xf32> -> vector<8x128xf32>
    %c0_3 = arith.constant 0 : index
    %c0_4 = arith.constant 0 : index
    %3 = vector.load %arg3[%c0_3, %c0_4] : memref<8x1xf32, #tpu.memory_space<vmem>>, vector<8x1xf32>
    %4 = vector.broadcast %3 : vector<8x1xf32> to vector<8x128xf32>
    %5 = arith.addf %2, %4 : vector<8x128xf32>
    %cst_5 = arith.constant 0.000000e+00 : f32
    %6 = vector.broadcast %cst_5 : f32 to vector<8x128xf32>
    %7 = arith.cmpf ogt, %5, %6 : vector<8x128xf32>
    %cst_6 = arith.constant 2.000000e-01 : f32
    %8 = vector.broadcast %cst_6 : f32 to vector<8x128xf32>
    %9 = arith.mulf %8, %5 : vector<8x128xf32>
    %10 = arith.select %7, %5, %9 : vector<8x128xi1>, vector<8x128xf32>
    %c0_7 = arith.constant 0 : index
    %c0_8 = arith.constant 0 : index
    %11 = vector.load %arg4[%c0_7, %c0_8] : memref<8x128xf32, #tpu.memory_space<vmem>>, vector<8x128xf32>
    tpu.vector_store %arg4[%c0_7, %c0_8], %10 {strides = array<i32>} : memref<8x128xf32, #tpu.memory_space<vmem>>, vector<8x128xf32>,
    return
  }
  func.func @transform_0(%arg0: i32) -> (i32, i32) {
    %c0_i32 = arith.constant 0 : i32
    %c0_i32_0 = arith.constant 0 : i32
    %c0_i32_1 = arith.constant 0 : i32
    return %c0_i32, %c0_i32_0 : i32, i32
  }
  func.func @transform_1(%arg0: i32) -> (i32, i32) {
    %c0_i32 = arith.constant 0 : i32
    %c0_i32_0 = arith.constant 0 : i32
    return %c0_i32, %arg0 : i32, i32
  }
  func.func @transform_2(%arg0: i32) -> (i32, i32) {
    %c0_i32 = arith.constant 0 : i32
    %c0_i32_0 = arith.constant 0 : i32
    %c0_i32_1 = arith.constant 0 : i32
    return %c0_i32, %c0_i32_0 : i32, i32
  }
  func.func @transform_3(%arg0: i32) -> (i32, i32) {
    %c0_i32 = arith.constant 0 : i32
    %c0_i32_0 = arith.constant 0 : i32
    return %c0_i32, %arg0 : i32, i32
  }
}

module attributes {stable_mosaic.version = 11 : i64} {
  func.func @_fused_matmul_t_kernel(%arg0: i32, %arg1: memref<16x128xbf16, #tpu.memory_space<vmem>>, %arg2: memref<128x32xbf16, #tpu.memory_space<vmem>>, %arg3: memref<16x1xf32, #tpu.memory_space<vmem>>, %arg4: memref<16x32xf32, #tpu.memory_space<vmem>>) attributes {dimension_semantics = [#tpu.dimension_semantics<parallel>], iteration_bounds = array<i64: 1>, scalar_prefetch = 0 : i64, scratch_operands = 0 : i64, tpu.core_type = #tpu.core_type<tc>, window_params = [{pipeline_mode = #tpu.pipeline_mode<synchronous>, transform_indices = @transform_0, window_bounds = array<i64: 16, 128>}, {transform_indices = @transform_1, window_bounds = array<i64: 128, 32>}, {pipeline_mode = #tpu.pipeline_mode<synchronous>, transform_indices = @transform_2, window_bounds = array<i64: 16, 1>}, {transform_indices = @transform_3, window_bounds = array<i64: 16, 32>}]} {
    %c0 = arith.constant 0 : index
    %c0_0 = arith.constant 0 : index
    %0 = vector.load %arg1[%c0, %c0_0] : memref<16x128xbf16, #tpu.memory_space<vmem>>, vector<16x128xbf16>
    %c0_1 = arith.constant 0 : index
    %c0_2 = arith.constant 0 : index
    %1 = vector.load %arg2[%c0_1, %c0_2] : memref<128x32xbf16, #tpu.memory_space<vmem>>, vector<128x32xbf16>
    %cst = arith.constant dense<0.000000e+00> : vector<16x32xf32>
    %2 = tpu.matmul %0, %1, %cst {dimension_numbers = #tpu.dot_dimension_numbers<[1], [0], [0], [1], [0, 0, 1, 1], [], []>} : vector<16x128xbf16>, vector<128x32xbf16>, vector<16x32xf32> -> vector<16x32xf32>
    %c0_3 = arith.constant 0 : index
    %c0_4 = arith.constant 0 : index
    %3 = vector.load %arg3[%c0_3, %c0_4] : memref<16x1xf32, #tpu.memory_space<vmem>>, vector<16x1xf32>
    %4 = vector.broadcast %3 : vector<16x1xf32> to vector<16x32xf32>
    %5 = arith.addf %2, %4 : vector<16x32xf32>
    %cst_5 = arith.constant 0.000000e+00 : f32
    %6 = vector.broadcast %cst_5 : f32 to vector<16x32xf32>
    %7 = arith.cmpf ogt, %5, %6 : vector<16x32xf32>
    %cst_6 = arith.constant 2.000000e-01 : f32
    %8 = vector.broadcast %cst_6 : f32 to vector<16x32xf32>
    %9 = arith.mulf %8, %5 : vector<16x32xf32>
    %10 = arith.select %7, %5, %9 : vector<16x32xi1>, vector<16x32xf32>
    %c0_7 = arith.constant 0 : index
    %c0_8 = arith.constant 0 : index
    %11 = vector.load %arg4[%c0_7, %c0_8] : memref<16x32xf32, #tpu.memory_space<vmem>>, vector<16x32xf32>
    tpu.vector_store %arg4[%c0_7, %c0_8], %10 {strides = array<i32>} : memref<16x32xf32, #tpu.memory_space<vmem>>, vector<16x32xf32>,
    return
  }
  func.func @transform_0(%arg0: i32) -> (i32, i32) {
    %c0_i32 = arith.constant 0 : i32
    %c0_i32_0 = arith.constant 0 : i32
    %c0_i32_1 = arith.constant 0 : i32
    return %c0_i32, %c0_i32_0 : i32, i32
  }
  func.func @transform_1(%arg0: i32) -> (i32, i32) {
    %c0_i32 = arith.constant 0 : i32
    %c0_i32_0 = arith.constant 0 : i32
    return %c0_i32, %arg0 : i32, i32
  }
  func.func @transform_2(%arg0: i32) -> (i32, i32) {
    %c0_i32 = arith.constant 0 : i32
    %c0_i32_0 = arith.constant 0 : i32
    %c0_i32_1 = arith.constant 0 : i32
    return %c0_i32, %c0_i32_0 : i32, i32
  }
  func.func @transform_3(%arg0: i32) -> (i32, i32) {
    %c0_i32 = arith.constant 0 : i32
    %c0_i32_0 = arith.constant 0 : i32
    return %c0_i32, %arg0 : i32, i32
  }
}

module attributes {stable_mosaic.version = 11 : i64} {
  func.func @_fused_matmul_t_kernel(%arg0: i32, %arg1: memref<8x256xbf16, #tpu.memory_space<vmem>>, %arg2: memref<256x2xbf16, #tpu.memory_space<vmem>>, %arg3: memref<8x1xf32, #tpu.memory_space<vmem>>, %arg4: memref<8x2xf32, #tpu.memory_space<vmem>>) attributes {dimension_semantics = [#tpu.dimension_semantics<parallel>], iteration_bounds = array<i64: 1>, scalar_prefetch = 0 : i64, scratch_operands = 0 : i64, tpu.core_type = #tpu.core_type<tc>, window_params = [{pipeline_mode = #tpu.pipeline_mode<synchronous>, transform_indices = @transform_0, window_bounds = array<i64: 8, 256>}, {transform_indices = @transform_1, window_bounds = array<i64: 256, 2>}, {pipeline_mode = #tpu.pipeline_mode<synchronous>, transform_indices = @transform_2, window_bounds = array<i64: 8, 1>}, {transform_indices = @transform_3, window_bounds = array<i64: 8, 2>}]} {
    %c0 = arith.constant 0 : index
    %c0_0 = arith.constant 0 : index
    %0 = vector.load %arg1[%c0, %c0_0] : memref<8x256xbf16, #tpu.memory_space<vmem>>, vector<8x256xbf16>
    %c0_1 = arith.constant 0 : index
    %c0_2 = arith.constant 0 : index
    %1 = vector.load %arg2[%c0_1, %c0_2] : memref<256x2xbf16, #tpu.memory_space<vmem>>, vector<256x2xbf16>
    %cst = arith.constant dense<0.000000e+00> : vector<8x2xf32>
    %2 = tpu.matmul %0, %1, %cst {dimension_numbers = #tpu.dot_dimension_numbers<[1], [0], [0], [1], [0, 0, 1, 1], [], []>} : vector<8x256xbf16>, vector<256x2xbf16>, vector<8x2xf32> -> vector<8x2xf32>
    %c0_3 = arith.constant 0 : index
    %c0_4 = arith.constant 0 : index
    %3 = vector.load %arg3[%c0_3, %c0_4] : memref<8x1xf32, #tpu.memory_space<vmem>>, vector<8x1xf32>
    %4 = vector.broadcast %3 : vector<8x1xf32> to vector<8x2xf32>
    %5 = arith.addf %2, %4 : vector<8x2xf32>
    %c0_5 = arith.constant 0 : index
    %c0_6 = arith.constant 0 : index
    %6 = vector.load %arg4[%c0_5, %c0_6] : memref<8x2xf32, #tpu.memory_space<vmem>>, vector<8x2xf32>
    tpu.vector_store %arg4[%c0_5, %c0_6], %5 {strides = array<i32>} : memref<8x2xf32, #tpu.memory_space<vmem>>, vector<8x2xf32>,
    return
  }
  func.func @transform_0(%arg0: i32) -> (i32, i32) {
    %c0_i32 = arith.constant 0 : i32
    %c0_i32_0 = arith.constant 0 : i32
    %c0_i32_1 = arith.constant 0 : i32
    return %c0_i32, %c0_i32_0 : i32, i32
  }
  func.func @transform_1(%arg0: i32) -> (i32, i32) {
    %c0_i32 = arith.constant 0 : i32
    %c0_i32_0 = arith.constant 0 : i32
    return %c0_i32, %arg0 : i32, i32
  }
  func.func @transform_2(%arg0: i32) -> (i32, i32) {
    %c0_i32 = arith.constant 0 : i32
    %c0_i32_0 = arith.constant 0 : i32
    %c0_i32_1 = arith.constant 0 : i32
    return %c0_i32, %c0_i32_0 : i32, i32
  }
  func.func @transform_3(%arg0: i32) -> (i32, i32) {
    %c0_i32 = arith.constant 0 : i32
    %c0_i32_0 = arith.constant 0 : i32
    return %c0_i32, %arg0 : i32, i32
  }
}

module attributes {stable_mosaic.version = 11 : i64} {
  func.func @_fused_matmul_t_kernel(%arg0: i32, %arg1: memref<1x72xbf16, #tpu.memory_space<vmem>>, %arg2: memref<72x2xbf16, #tpu.memory_space<vmem>>, %arg3: memref<1x1xf32, #tpu.memory_space<vmem>>, %arg4: memref<1x2xf32, #tpu.memory_space<vmem>>) attributes {dimension_semantics = [#tpu.dimension_semantics<parallel>], iteration_bounds = array<i64: 1>, scalar_prefetch = 0 : i64, scratch_operands = 0 : i64, tpu.core_type = #tpu.core_type<tc>, window_params = [{pipeline_mode = #tpu.pipeline_mode<synchronous>, transform_indices = @transform_0, window_bounds = array<i64: 1, 72>}, {transform_indices = @transform_1, window_bounds = array<i64: 72, 2>}, {pipeline_mode = #tpu.pipeline_mode<synchronous>, transform_indices = @transform_2, window_bounds = array<i64: 1, 1>}, {transform_indices = @transform_3, window_bounds = array<i64: 1, 2>}]} {
    %c0 = arith.constant 0 : index
    %c0_0 = arith.constant 0 : index
    %0 = vector.load %arg1[%c0, %c0_0] : memref<1x72xbf16, #tpu.memory_space<vmem>>, vector<1x72xbf16>
    %c0_1 = arith.constant 0 : index
    %c0_2 = arith.constant 0 : index
    %1 = vector.load %arg2[%c0_1, %c0_2] : memref<72x2xbf16, #tpu.memory_space<vmem>>, vector<72x2xbf16>
    %cst = arith.constant dense<0.000000e+00> : vector<1x2xf32>
    %2 = tpu.matmul %0, %1, %cst {dimension_numbers = #tpu.dot_dimension_numbers<[1], [0], [0], [1], [0, 0, 1, 1], [], []>} : vector<1x72xbf16>, vector<72x2xbf16>, vector<1x2xf32> -> vector<1x2xf32>
    %c0_3 = arith.constant 0 : index
    %c0_4 = arith.constant 0 : index
    %3 = vector.load %arg3[%c0_3, %c0_4] : memref<1x1xf32, #tpu.memory_space<vmem>>, vector<1x1xf32>
    %4 = vector.broadcast %3 : vector<1x1xf32> to vector<1x2xf32>
    %5 = arith.addf %2, %4 : vector<1x2xf32>
    %cst_5 = arith.constant 0.000000e+00 : f32
    %6 = vector.broadcast %cst_5 : f32 to vector<1x2xf32>
    %7 = arith.subf %6, %5 : vector<1x2xf32>
    %8 = math.exp %7 : vector<1x2xf32>
    %cst_6 = arith.constant 1.000000e+00 : f32
    %9 = vector.broadcast %cst_6 : f32 to vector<1x2xf32>
    %10 = arith.addf %9, %8 : vector<1x2xf32>
    %cst_7 = arith.constant 1.000000e+00 : f32
    %11 = vector.broadcast %cst_7 : f32 to vector<1x2xf32>
    %12 = arith.divf %11, %10 : vector<1x2xf32>
    %c0_8 = arith.constant 0 : index
    %c0_9 = arith.constant 0 : index
    %13 = vector.load %arg4[%c0_8, %c0_9] : memref<1x2xf32, #tpu.memory_space<vmem>>, vector<1x2xf32>
    tpu.vector_store %arg4[%c0_8, %c0_9], %12 {strides = array<i32>} : memref<1x2xf32, #tpu.memory_space<vmem>>, vector<1x2xf32>,
    return
  }
  func.func @transform_0(%arg0: i32) -> (i32, i32) {
    %c0_i32 = arith.constant 0 : i32
    %c0_i32_0 = arith.constant 0 : i32
    %c0_i32_1 = arith.constant 0 : i32
    return %c0_i32, %c0_i32_0 : i32, i32
  }
  func.func @transform_1(%arg0: i32) -> (i32, i32) {
    %c0_i32 = arith.constant 0 : i32
    %c0_i32_0 = arith.constant 0 : i32
    return %c0_i32, %arg0 : i32, i32
  }
  func.func @transform_2(%arg0: i32) -> (i32, i32) {
    %c0_i32 = arith.constant 0 : i32
    %c0_i32_0 = arith.constant 0 : i32
    %c0_i32_1 = arith.constant 0 : i32
    return %c0_i32, %c0_i32_0 : i32, i32
  }
  func.func @transform_3(%arg0: i32) -> (i32, i32) {
    %c0_i32 = arith.constant 0 : i32
    %c0_i32_0 = arith.constant 0 : i32
    return %c0_i32, %arg0 : i32, i32
  }
}

</mosaic_0001>

<llo_original>
// kernel: _lambda_.4
$region0: #{_lambda_.4}
  #allocation0 [shape = 'u32[]', space=smem, size = 0x4, offset = 0x4, fixed_abs, tag = 'smem constant byte address 0x4 - core index']
  #allocation1 [shape = 'u32[72,128]{1,0:T(1,128)}', space=vmem, size = 0x9000, scoped, tag = 'internal scratch']
  %s0 = inlined_call_operand.vmem [shape: bf16[8,48], index: 0, kind: input, shape index: {}]
  %s1 = inlined_call_operand.vmem [shape: bf16[48,128], index: 1, kind: input, shape index: {}]
  %s2 = inlined_call_operand.vmem [shape: f32[8,1], index: 2, kind: input, shape index: {}]
  %s3 = inlined_call_operand.vmem [shape: f32[8,128], index: 3, kind: output, shape index: {}]
  %s4 = sld [smem:[#allocation0]]
  $region22: #{_lambda_.4} parent=0
    _
  %s6 = ssub.s32 1, %s4
  %s7 = scalar_select 0, %s6, %s4
  // Predicated region
  $region2: #{_lambda_.4} parent=0 // pred_check
    _
  $region3: #{_lambda_.4} parent=0 // pred_check_branch
    %9 = sbr.rel (0) target = $region5
  $region4: #{_lambda_.4} parent=0 // pred_region
    _
  $region5: #{_lambda_.4} parent=0 // pred_fallthru
    _
  // Predicated region
  $region6: #{_lambda_.4} parent=0 // pred_check
    _
  $region7: #{_lambda_.4} parent=0 // pred_check_branch
    %11 = sbr.rel (0) target = $region9
  $region8: #{_lambda_.4} parent=0 // pred_region
    _
  $region9: #{_lambda_.4} parent=0 // pred_fallthru
    _
  // Predicated region
  $region10: #{_lambda_.4} parent=0 // pred_check
    _
  $region11: #{_lambda_.4} parent=0 // pred_check_branch
    %13 = sbr.rel (0) target = $region13
  $region12: #{_lambda_.4} parent=0 // pred_region
    _
  $region13: #{_lambda_.4} parent=0 // pred_fallthru
    _
  %v15 = vld [vmem:[%s0] sm:$0xf]
  %v16 = vld [vmem:[%s1] sm:$0xf]
  %v17 = vld [vmem:[%s1 + $0x4] sm:$0xf]
  %v18 = vld [vmem:[%s1 + $0x8] sm:$0xf]
  %v19 = vld [vmem:[%s1 + $0xc] sm:$0xf]
  %v20 = vld [vmem:[%s1 + $0x10] sm:$0xf]
  %v21 = vld [vmem:[%s1 + $0x14] sm:$0xf]
  %v22 = vld [vmem:[%s2] sm:$0xff]
  %24 = vset.pattern.permute.xlu0 0
  %25 = vperm.xlu0 %24, %v22
  %v26 = vpop.permute.xlu0 %25
  %v34 = vunpack.c.l.b16 %v16
  %v35 = vunpack.c.l.b16 %v17
  %v36 = vunpack.c.l.b16 %v18
  %v37 = vunpack.c.l.b16 %v19
  %v38 = vunpack.c.l.b16 %v20
  %v39 = vunpack.c.l.b16 %v21
  %v40 = vpack.c.b16 %v35, %v34
  %v41 = vpack.c.b16 %v37, %v36
  %v42 = vpack.c.b16 %v39, %v38
  %vm46 = vcmask 392192
  %v48 = vsel %vm46, %v15, 0
  %50 = vmatpush.bf16.msra.mxu0 0
  %51 = vmatpush.bf16.msra.mxu0 0
  %52 = vmatpush.bf16.msra.mxu0 0
  %53 = vmatpush.bf16.msra.mxu0 0
  %54 = vmatpush.bf16.msra.mxu0 0
  %55 = vmatpush.bf16.msra.mxu0 %v42
  %56 = vmatpush.bf16.msra.mxu0 %v41
  %57 = vmatpush.bf16.msra.mxu0 %v40
  %58 = vmatmul.bf16.gmra.mxu0 %v48
  %v59 = vpop.f32.mrf.mxu0
  %v60 = vadd.f32 %v26, %v59
  %v61 = vpop.f32.mrf.mxu0
  %62 = vdwg.mxu0
  %vm63 = vcmp.gt.f32.partialorder %v60, 0.0
  %v64 = vmul.f32 %v60, 0.2
  %v65 = vsel %vm63, %v60, %v64
  %66 = vst [vmem:[%s3] sm:$0xff] %v65
  // Predicated region
  $region14: #{_lambda_.4} parent=0 // pred_check
    _
  $region15: #{_lambda_.4} parent=0 // pred_check_branch
    %68 = sbr.rel (0) target = $region17
  $region16: #{_lambda_.4} parent=0 // pred_region
    _
  $region17: #{_lambda_.4} parent=0 // pred_fallthru
    _
  // Predicated region
  $region18: #{_lambda_.4} parent=0 // pred_check
    _
  $region19: #{_lambda_.4} parent=0 // pred_check_branch
    %70 = sbr.rel (0) target = $region21
  $region20: #{_lambda_.4} parent=0 // pred_region
    _
  $region21: #{_lambda_.4} parent=0 // pred_fallthru
    _

// kernel: _lambda_.5
$region0: #{_lambda_.5}
  #allocation0 [shape = 'u32[]', space=smem, size = 0x4, offset = 0x4, fixed_abs, tag = 'smem constant byte address 0x4 - core index']
  #allocation1 [shape = 'u32[72,128]{1,0:T(1,128)}', space=vmem, size = 0x9000, scoped, tag = 'internal scratch']
  %s0 = inlined_call_operand.vmem [shape: bf16[16,128], index: 0, kind: input, shape index: {}]
  %s1 = inlined_call_operand.vmem [shape: bf16[128,32], index: 1, kind: input, shape index: {}]
  %s2 = inlined_call_operand.vmem [shape: f32[16,1], index: 2, kind: input, shape index: {}]
  %s3 = inlined_call_operand.vmem [shape: f32[16,32], index: 3, kind: output, shape index: {}]
  %s4 = sld [smem:[#allocation0]]
  $region22: #{_lambda_.5} parent=0
    _
  %s6 = ssub.s32 1, %s4
  %s7 = scalar_select 0, %s6, %s4
  // Predicated region
  $region2: #{_lambda_.5} parent=0 // pred_check
    _
  $region3: #{_lambda_.5} parent=0 // pred_check_branch
    %9 = sbr.rel (0) target = $region5
  $region4: #{_lambda_.5} parent=0 // pred_region
    _
  $region5: #{_lambda_.5} parent=0 // pred_fallthru
    _
  // Predicated region
  $region6: #{_lambda_.5} parent=0 // pred_check
    _
  $region7: #{_lambda_.5} parent=0 // pred_check_branch
    %11 = sbr.rel (0) target = $region9
  $region8: #{_lambda_.5} parent=0 // pred_region
    _
  $region9: #{_lambda_.5} parent=0 // pred_fallthru
    _
  // Predicated region
  $region10: #{_lambda_.5} parent=0 // pred_check
    _
  $region11: #{_lambda_.5} parent=0 // pred_check_branch
    %13 = sbr.rel (0) target = $region13
  $region12: #{_lambda_.5} parent=0 // pred_region
    _
  $region13: #{_lambda_.5} parent=0 // pred_fallthru
    _
  %v14 = vld [vmem:[%s0] sm:$0xf]
  %v15 = vld [vmem:[%s0 + $0x4] sm:$0xf]
  %v16 = vld [vmem:[%s1] sm:$0xf]
  %v17 = vld [vmem:[%s1 + $0x4] sm:$0xf]
  %v18 = vld [vmem:[%s1 + $0x8] sm:$0xf]
  %v19 = vld [vmem:[%s1 + $0xc] sm:$0xf]
  %v20 = vld [vmem:[%s1 + $0x10] sm:$0xf]
  %v21 = vld [vmem:[%s1 + $0x14] sm:$0xf]
  %v22 = vld [vmem:[%s1 + $0x18] sm:$0xf]
  %v23 = vld [vmem:[%s1 + $0x1c] sm:$0xf]
  %v24 = vld [vmem:[%s1 + $0x20] sm:$0xf]
  %v25 = vld [vmem:[%s1 + $0x24] sm:$0xf]
  %v26 = vld [vmem:[%s1 + $0x28] sm:$0xf]
  %v27 = vld [vmem:[%s1 + $0x2c] sm:$0xf]
  %v28 = vld [vmem:[%s1 + $0x30] sm:$0xf]
  %v29 = vld [vmem:[%s1 + $0x34] sm:$0xf]
  %v30 = vld [vmem:[%s1 + $0x38] sm:$0xf]
  %v31 = vld [vmem:[%s1 + $0x3c] sm:$0xf]
  %v32 = vld [vmem:[%s2] sm:$0xff]
  %v33 = vld [vmem:[%s2 + $0x8] sm:$0xff]
  %35 = vset.pattern.permute.xlu0 0
  %36 = vperm.xlu0 %35, %v32
  %v37 = vpop.permute.xlu0 %36
  %40 = vset.pattern.permute.xlu0 0
  %41 = vperm.xlu0 %40, %v33
  %v42 = vpop.permute.xlu0 %41
  %v46 = vunpack.c.l.b16 %v14
  %v47 = vunpack.c.l.b16 %v15
  %v48 = vpack.c.b16 %v47, %v46
  %v66 = vunpack.c.l.b16 %v16
  %v67 = vunpack.c.l.b16 %v17
  %v68 = vunpack.c.l.b16 %v18
  %v69 = vunpack.c.l.b16 %v19
  %v70 = vunpack.c.l.b16 %v20
  %v71 = vunpack.c.l.b16 %v21
  %v72 = vunpack.c.l.b16 %v22
  %v73 = vunpack.c.l.b16 %v23
  %v74 = vunpack.c.l.b16 %v24
  %v75 = vunpack.c.l.b16 %v25
  %v76 = vunpack.c.l.b16 %v26
  %v77 = vunpack.c.l.b16 %v27
  %v78 = vunpack.c.l.b16 %v28
  %v79 = vunpack.c.l.b16 %v29
  %v80 = vunpack.c.l.b16 %v30
  %v81 = vunpack.c.l.b16 %v31
  %v82 = vpack.c.b16 %v67, %v66
  %v83 = vpack.c.b16 %v69, %v68
  %v84 = vpack.c.b16 %v71, %v70
  %v85 = vpack.c.b16 %v73, %v72
  %v86 = vpack.c.b16 %v75, %v74
  %v87 = vpack.c.b16 %v77, %v76
  %v88 = vpack.c.b16 %v79, %v78
  %v89 = vpack.c.b16 %v81, %v80
  %98 = vmatpush.bf16.msra.mxu0 %v89
  %99 = vmatpush.bf16.msra.mxu0 %v88
  %100 = vmatpush.bf16.msra.mxu0 %v87
  %101 = vmatpush.bf16.msra.mxu0 %v86
  %102 = vmatpush.bf16.msra.mxu0 %v85
  %103 = vmatpush.bf16.msra.mxu0 %v84
  %104 = vmatpush.bf16.msra.mxu0 %v83
  %105 = vmatpush.bf16.msra.mxu0 %v82
  %106 = vmatmul.bf16.gmra.mxu0 %v48
  %v107 = vpop.f32.mrf.mxu0
  %v108 = vadd.f32 %v37, %v107
  %v109 = vpop.f32.mrf.mxu0
  %v110 = vadd.f32 %v42, %v109
  %111 = vdwg.mxu0
  %vm112 = vcmp.gt.f32.partialorder %v108, 0.0
  %vm113 = vcmp.gt.f32.partialorder %v110, 0.0
  %v114 = vmul.f32 %v108, 0.2
  %v115 = vmul.f32 %v110, 0.2
  %v116 = vsel %vm112, %v108, %v114
  %v117 = vsel %vm113, %v110, %v115
  %vm118 = vcmask 261120
  %119 = vst.msk [vmem:[%s3] sm:$0xff] %vm118, %v116
  %120 = vst.msk [vmem:[%s3 + $0x8] sm:$0xff] %vm118, %v117
  // Predicated region
  $region14: #{_lambda_.5} parent=0 // pred_check
    _
  $region15: #{_lambda_.5} parent=0 // pred_check_branch
    %122 = sbr.rel (0) target = $region17
  $region16: #{_lambda_.5} parent=0 // pred_region
    _
  $region17: #{_lambda_.5} parent=0 // pred_fallthru
    _
  // Predicated region
  $region18: #{_lambda_.5} parent=0 // pred_check
    _
  $region19: #{_lambda_.5} parent=0 // pred_check_branch
    %124 = sbr.rel (0) target = $region21
  $region20: #{_lambda_.5} parent=0 // pred_region
    _
  $region21: #{_lambda_.5} parent=0 // pred_fallthru
    _

// kernel: _lambda_.6
$region0: #{_lambda_.6}
  #allocation0 [shape = 'u32[]', space=smem, size = 0x4, offset = 0x4, fixed_abs, tag = 'smem constant byte address 0x4 - core index']
  #allocation1 [shape = 'u32[72,128]{1,0:T(1,128)}', space=vmem, size = 0x9000, scoped, tag = 'internal scratch']
  %s0 = inlined_call_operand.vmem [shape: bf16[8,256], index: 0, kind: input, shape index: {}]
  %s1 = inlined_call_operand.vmem [shape: bf16[256,2], index: 1, kind: input, shape index: {}]
  %s2 = inlined_call_operand.vmem [shape: f32[8,1], index: 2, kind: input, shape index: {}]
  %s3 = inlined_call_operand.vmem [shape: f32[8,2], index: 3, kind: output, shape index: {}]
  %s4 = sld [smem:[#allocation0]]
  $region22: #{_lambda_.6} parent=0
    _
  %s6 = ssub.s32 1, %s4
  %s7 = scalar_select 0, %s6, %s4
  // Predicated region
  $region2: #{_lambda_.6} parent=0 // pred_check
    _
  $region3: #{_lambda_.6} parent=0 // pred_check_branch
    %9 = sbr.rel (0) target = $region5
  $region4: #{_lambda_.6} parent=0 // pred_region
    _
  $region5: #{_lambda_.6} parent=0 // pred_fallthru
    _
  // Predicated region
  $region6: #{_lambda_.6} parent=0 // pred_check
    _
  $region7: #{_lambda_.6} parent=0 // pred_check_branch
    %11 = sbr.rel (0) target = $region9
  $region8: #{_lambda_.6} parent=0 // pred_region
    _
  $region9: #{_lambda_.6} parent=0 // pred_fallthru
    _
  // Predicated region
  $region10: #{_lambda_.6} parent=0 // pred_check
    _
  $region11: #{_lambda_.6} parent=0 // pred_check_branch
    %13 = sbr.rel (0) target = $region13
  $region12: #{_lambda_.6} parent=0 // pred_region
    _
  $region13: #{_lambda_.6} parent=0 // pred_fallthru
    _
  %v14 = vld [vmem:[%s0] sm:$0xff]
  %v15 = vld [vmem:[%s1] sm:$0xf]
  %v16 = vld [vmem:[%s1 + $0x4] sm:$0xf]
  %v17 = vld [vmem:[%s1 + $0x8] sm:$0xf]
  %v18 = vld [vmem:[%s1 + $0xc] sm:$0xf]
  %v19 = vld [vmem:[%s1 + $0x10] sm:$0xf]
  %v20 = vld [vmem:[%s1 + $0x14] sm:$0xf]
  %v21 = vld [vmem:[%s1 + $0x18] sm:$0xf]
  %v22 = vld [vmem:[%s1 + $0x1c] sm:$0xf]
  %v23 = vld [vmem:[%s1 + $0x20] sm:$0xf]
  %v24 = vld [vmem:[%s1 + $0x24] sm:$0xf]
  %v25 = vld [vmem:[%s1 + $0x28] sm:$0xf]
  %v26 = vld [vmem:[%s1 + $0x2c] sm:$0xf]
  %v27 = vld [vmem:[%s1 + $0x30] sm:$0xf]
  %v28 = vld [vmem:[%s1 + $0x34] sm:$0xf]
  %v29 = vld [vmem:[%s1 + $0x38] sm:$0xf]
  %v30 = vld [vmem:[%s1 + $0x3c] sm:$0xf]
  %v31 = vld [vmem:[%s1 + $0x40] sm:$0xf]
  %v32 = vld [vmem:[%s1 + $0x44] sm:$0xf]
  %v33 = vld [vmem:[%s1 + $0x48] sm:$0xf]
  %v34 = vld [vmem:[%s1 + $0x4c] sm:$0xf]
  %v35 = vld [vmem:[%s1 + $0x50] sm:$0xf]
  %v36 = vld [vmem:[%s1 + $0x54] sm:$0xf]
  %v37 = vld [vmem:[%s1 + $0x58] sm:$0xf]
  %v38 = vld [vmem:[%s1 + $0x5c] sm:$0xf]
  %v39 = vld [vmem:[%s1 + $0x60] sm:$0xf]
  %v40 = vld [vmem:[%s1 + $0x64] sm:$0xf]
  %v41 = vld [vmem:[%s1 + $0x68] sm:$0xf]
  %v42 = vld [vmem:[%s1 + $0x6c] sm:$0xf]
  %v43 = vld [vmem:[%s1 + $0x70] sm:$0xf]
  %v44 = vld [vmem:[%s1 + $0x74] sm:$0xf]
  %v45 = vld [vmem:[%s1 + $0x78] sm:$0xf]
  %v46 = vld [vmem:[%s1 + $0x7c] sm:$0xf]
  %v47 = vld [vmem:[%s2] sm:$0xff]
  %49 = vset.pattern.permute.xlu0 0
  %50 = vperm.xlu0 %49, %v47
  %v51 = vpop.permute.xlu0 %50
  %v54 = vunpack.c.l.b16 %v14
  %v55 = vunpack.c.h.b16 %v14
  %v56 = vpack.c.b16 %v54, %v54
  %v57 = vpack.c.b16 %v55, %v55
  %v92 = vunpack.c.l.b16 %v15
  %v93 = vunpack.c.l.b16 %v16
  %v94 = vunpack.c.l.b16 %v17
  %v95 = vunpack.c.l.b16 %v18
  %v96 = vunpack.c.l.b16 %v19
  %v97 = vunpack.c.l.b16 %v20
  %v98 = vunpack.c.l.b16 %v21
  %v99 = vunpack.c.l.b16 %v22
  %v100 = vunpack.c.l.b16 %v23
  %v101 = vunpack.c.l.b16 %v24
  %v102 = vunpack.c.l.b16 %v25
  %v103 = vunpack.c.l.b16 %v26
  %v104 = vunpack.c.l.b16 %v27
  %v105 = vunpack.c.l.b16 %v28
  %v106 = vunpack.c.l.b16 %v29
  %v107 = vunpack.c.l.b16 %v30
  %v108 = vunpack.c.l.b16 %v31
  %v109 = vunpack.c.l.b16 %v32
  %v110 = vunpack.c.l.b16 %v33
  %v111 = vunpack.c.l.b16 %v34
  %v112 = vunpack.c.l.b16 %v35
  %v113 = vunpack.c.l.b16 %v36
  %v114 = vunpack.c.l.b16 %v37
  %v115 = vunpack.c.l.b16 %v38
  %v116 = vunpack.c.l.b16 %v39
  %v117 = vunpack.c.l.b16 %v40
  %v118 = vunpack.c.l.b16 %v41
  %v119 = vunpack.c.l.b16 %v42
  %v120 = vunpack.c.l.b16 %v43
  %v121 = vunpack.c.l.b16 %v44
  %v122 = vunpack.c.l.b16 %v45
  %v123 = vunpack.c.l.b16 %v46
  %v124 = vpack.c.b16 %v93, %v92
  %v125 = vpack.c.b16 %v95, %v94
  %v126 = vpack.c.b16 %v97, %v96
  %v127 = vpack.c.b16 %v99, %v98
  %v128 = vpack.c.b16 %v101, %v100
  %v129 = vpack.c.b16 %v103, %v102
  %v130 = vpack.c.b16 %v105, %v104
  %v131 = vpack.c.b16 %v107, %v106
  %v132 = vpack.c.b16 %v109, %v108
  %v133 = vpack.c.b16 %v111, %v110
  %v134 = vpack.c.b16 %v113, %v112
  %v135 = vpack.c.b16 %v115, %v114
  %v136 = vpack.c.b16 %v117, %v116
  %v137 = vpack.c.b16 %v119, %v118
  %v138 = vpack.c.b16 %v121, %v120
  %v139 = vpack.c.b16 %v123, %v122
  %156 = vmatpush.bf16.msra.mxu0 %v131
  %157 = vmatpush.bf16.msra.mxu0 %v130
  %158 = vmatpush.bf16.msra.mxu0 %v129
  %159 = vmatpush.bf16.msra.mxu0 %v128
  %160 = vmatpush.bf16.msra.mxu0 %v127
  %161 = vmatpush.bf16.msra.mxu0 %v126
  %162 = vmatpush.bf16.msra.mxu0 %v125
  %163 = vmatpush.bf16.msra.mxu0 %v124
  %164 = vmatmul.bf16.gmra.mxu0 %v56
  %v165 = vpop.f32.mrf.mxu0
  %v166 = vadd.f32 %v51, %v165
  %v167 = vpop.f32.mrf.mxu0
  %168 = vdwg.mxu0
  %169 = vmatpush.bf16.msra.mxu0 %v139
  %170 = vmatpush.bf16.msra.mxu0 %v138
  %171 = vmatpush.bf16.msra.mxu0 %v137
  %172 = vmatpush.bf16.msra.mxu0 %v136
  %173 = vmatpush.bf16.msra.mxu0 %v135
  %174 = vmatpush.bf16.msra.mxu0 %v134
  %175 = vmatpush.bf16.msra.mxu0 %v133
  %176 = vmatpush.bf16.msra.mxu0 %v132
  %177 = vmatmul.bf16.gmra.mxu0 %v57
  %v178 = vpop.f32.mrf.mxu0
  %v179 = vadd.f32 %v166, %v178
  %v180 = vpop.f32.mrf.mxu0
  %181 = vdwg.mxu0
  %vm182 = vcmask 15360
  %183 = vst.msk [vmem:[%s3] sm:$0xff] %vm182, %v179
  // Predicated region
  $region14: #{_lambda_.6} parent=0 // pred_check
    _
  $region15: #{_lambda_.6} parent=0 // pred_check_branch
    %185 = sbr.rel (0) target = $region17
  $region16: #{_lambda_.6} parent=0 // pred_region
    _
  $region17: #{_lambda_.6} parent=0 // pred_fallthru
    _
  // Predicated region
  $region18: #{_lambda_.6} parent=0 // pred_check
    _
  $region19: #{_lambda_.6} parent=0 // pred_check_branch
    %187 = sbr.rel (0) target = $region21
  $region20: #{_lambda_.6} parent=0 // pred_region
    _
  $region21: #{_lambda_.6} parent=0 // pred_fallthru
    _

// kernel: _lambda_.7
$region0: #{_lambda_.7}
  #allocation0 [shape = 'u32[]', space=smem, size = 0x4, offset = 0x4, fixed_abs, tag = 'smem constant byte address 0x4 - core index']
  #allocation1 [shape = 'u32[72,128]{1,0:T(1,128)}', space=vmem, size = 0x9000, scoped, tag = 'internal scratch']
  #allocation2 [shape = 'f32[1,1]{1,0:T(1,128)S(1)}', space=vmem, size = 0x200, scoped, tag = 'scoped memory for _lambda_.7']
  %s0 = inlined_call_operand.vmem [shape: bf16[1,72], index: 0, kind: input, shape index: {}]
  %s1 = inlined_call_operand.vmem [shape: bf16[72,2], index: 1, kind: input, shape index: {}]
  %s2 = inlined_call_operand.<no memory space> [shape: f32[1,1], index: 2, kind: input, shape index: {}]
  %s3 = inlined_call_operand.hbm [shape: f32[1,2], index: 3, kind: output, shape index: {}]
  %s4 = sld [smem:[#allocation0]]
  $region22: #{_lambda_.7} parent=0
    _
  %s6 = ssub.s32 1, %s4
  %s7 = scalar_select 0, %s6, %s4
  %v8 = vstv %s2
  %9 = vst [vmem:[#allocation2] sm:$0x1] %v8
  $region1: #{_lambda_.7} parent=0
    #allocation3 [shape = 'u8[512]{0}', space=vmem, size = 0x400, scoped, tag = 'output window, operand 0, single buffered']
    #allocation4 [shape = 's32[1]{0}', space=sflag, size = 0x4, scoped, tag = 'scoped memory for _lambda_.7']
    %10 = vsyncpa [#allocation4], 0
    // Predicated region
    $region2: #{_lambda_.7} parent=1 // pred_check
      _
    $region3: #{_lambda_.7} parent=1 // pred_check_branch
      %12 = sbr.rel (0) target = $region5
    $region4: #{_lambda_.7} parent=1 // pred_region
      _
    $region5: #{_lambda_.7} parent=1 // pred_fallthru
      _
    // Predicated region
    $region6: #{_lambda_.7} parent=1 // pred_check
      _
    $region7: #{_lambda_.7} parent=1 // pred_check_branch
      %14 = sbr.rel (0) target = $region9
    $region8: #{_lambda_.7} parent=1 // pred_region
      _
    $region9: #{_lambda_.7} parent=1 // pred_fallthru
      _
    // Predicated region
    $region10: #{_lambda_.7} parent=1 // pred_check
      _
    $region11: #{_lambda_.7} parent=1 // pred_check_branch
      %16 = sbr.rel (0) target = $region13
    $region12: #{_lambda_.7} parent=1 // pred_region
      _
    $region13: #{_lambda_.7} parent=1 // pred_fallthru
      _
    %v18 = vld [vmem:[%s0] sm:$0x1]
    %v19 = vld [vmem:[%s1] sm:$0xf]
    %v20 = vld [vmem:[%s1 + $0x4] sm:$0xf]
    %v21 = vld [vmem:[%s1 + $0x8] sm:$0xf]
    %v22 = vld [vmem:[%s1 + $0xc] sm:$0xf]
    %v23 = vld [vmem:[%s1 + $0x10] sm:$0xf]
    %v24 = vld [vmem:[%s1 + $0x14] sm:$0xf]
    %v25 = vld [vmem:[%s1 + $0x18] sm:$0xf]
    %v26 = vld [vmem:[%s1 + $0x1c] sm:$0xf]
    %v27 = vld [vmem:[%s1 + $0x20] sm:$0xf]
    %v28 = vld [vmem:[#allocation2] sm:$0x1]
    %30 = vset.pattern.permute.xlu0 0
    %31 = vperm.xlu0 %30, %v28
    %v32 = vpop.permute.xlu0 %31
    %v34 = vperm.slane %v32, 0
    %v44 = vunpack.c.l.b16 %v19
    %v45 = vunpack.c.l.b16 %v20
    %v46 = vunpack.c.l.b16 %v21
    %v47 = vunpack.c.l.b16 %v22
    %v48 = vunpack.c.l.b16 %v23
    %v49 = vunpack.c.l.b16 %v24
    %v50 = vunpack.c.l.b16 %v25
    %v51 = vunpack.c.l.b16 %v26
    %v52 = vunpack.c.l.b16 %v27
    %v53 = vpack.c.b16 %v45, %v44
    %v54 = vpack.c.b16 %v47, %v46
    %v55 = vpack.c.b16 %v49, %v48
    %v56 = vpack.c.b16 %v51, %v50
    %v57 = vpack.c.b16 %v52, %v52
    %vm62 = vcmask 588800
    %v64 = vsel %vm62, %v18, 0
    %vm66 = vcmask 1043456
    %v68 = vsel %vm66, %v57, 0
    %70 = vmatpush.bf16.msra.mxu0 0
    %71 = vmatpush.bf16.msra.mxu0 0
    %72 = vmatpush.bf16.msra.mxu0 0
    %73 = vmatpush.bf16.msra.mxu0 %v68
    %74 = vmatpush.bf16.msra.mxu0 %v56
    %75 = vmatpush.bf16.msra.mxu0 %v55
    %76 = vmatpush.bf16.msra.mxu0 %v54
    %77 = vmatpush.bf16.msra.mxu0 %v53
    %78 = vmatmul.bf16.gmra.mxu0 %v64
    %v79 = vpop.f32.mrf.mxu0
    %v80 = vadd.f32 %v34, %v79
    %v81 = vpop.f32.mrf.mxu0
    %82 = vdwg.mxu0
    %v83 = vsub.f32 0.0, %v80
    %v84 = vmul.f32 %v83, 1.442695
    %v85 = vpow.pop %v84
    %v86 = vadd.f32 %v85, 1.0
    %v87 = vrcp.pop %v86
    %v88 = vmul.f32 %v86, %v87
    %v89 = vsub.f32 1.0, %v88
    %v90 = vmul.f32 %v87, %v89
    %v91 = vadd.f32 %v87, %v90
    %vm92 = vweird.f32 %v86
    %vm93 = vweird.f32 %v87
    %vm94 = vmor %vm92, %vm93
    %v95 = vsel %vm94, %v87, %v91
    %v96 = vand.u32 2147483647, %v86
    %vm97 = vcmp.eq.f32.partialorder %v96, 8.507059e+37
    %v98 = vand.u32 %v86, 2147483648
    %v99 = vor.u32 1.1754944e-38, %v98
    %v100 = vsel %vm97, %v99, %v95
    %v101 = vmul.f32 1.0, %v100
    %vm102 = vcmask 8192
    %103 = vst.msk [vmem:[#allocation3] sm:$0x1] %vm102, %v101
    // Predicated region
    $region14: #{_lambda_.7} parent=1 // pred_check
      _
    $region15: #{_lambda_.7} parent=1 // pred_check_branch
      %105 = sbr.rel (0) target = $region17
    $region16: #{_lambda_.7} parent=1 // pred_region
      %107 = vsyncadd [#allocation4], 0
      %s109 = sshll.u32 [#allocation3], 4
      %s110 = int_to_ptr.vmem [resolvable:$true] %s109
      %s111 = sshll.u32 %s3, 4
      %s112 = int_to_ptr.hbm [resolvable:$true] %s111
      %114 = dma.vmem_to_hbm [thread:$0]  %s110, 16, %s112, [#allocation4]
    $region17: #{_lambda_.7} parent=1 // pred_fallthru
      _
    // Predicated region
    $region18: #{_lambda_.7} parent=1 // pred_check
      _
    $region19: #{_lambda_.7} parent=1 // pred_check_branch
      %116 = sbr.rel (0) target = $region21
    $region20: #{_lambda_.7} parent=1 // pred_region
      %118 = dma.done [#allocation4], 16
    $region21: #{_lambda_.7} parent=1 // pred_fallthru
      _
    %119 = vsyncpa [#allocation4], 1

</llo_original>
